<compile_context>
chip_gen: v6e
topology: v6e:2x2x1
jax: 0.10.0
libtpu: 0.0.40
codegen_flags: <defaults>
</compile_context>

<pallas_src>
import functools

import jax
import jax.numpy as jnp
from jax.experimental import pallas as pl
from jax.experimental.pallas import tpu as pltpu

IGNORE_INDEX = 255
GAMMA = 2.0
ALPHA = 0.25


def _focal_ce_kernel(logit_ref, tgt_ref, out_ref, *,
                     l_total, tile_l, ignore_index, accumulate, mask_lanes):
    """Per-tile CE partial sums.

    Layout: class axis C on sublanes, spatial axis L on lanes (lane-dense).
    out_ref is a (2, tile_l) slab: row 0 = per-lane CE partial sum,
    row 1 = per-lane valid count.

    accumulate=True : slab stays resident across the 'arbitrary' j axis
                      (init at j==0, '+=' each step, one writeback per i).
    accumulate=False: each (i, j) grid point writes its own slab (both axes
                      'parallel' -> work for both v7x TensorCores).
    mask_lanes=False: L % tile_l == 0, ragged-tail handling compiled out.
    """
    logits = logit_ref[...].astype(jnp.float32)               # (C, tile_l)
    tgt = tgt_ref[...]                                         # (1, tile_l) int32

    valid = tgt != ignore_index                                # (1, tile_l)
    if mask_lanes:
        # Ragged last tile: positions >= L were never materialized in HBM;
        # scrub the unspecified data before exp/log so padding lanes stay finite.
        j = pl.program_id(1)
        pos = j * tile_l + jax.lax.broadcasted_iota(jnp.int32, (1, tile_l), 1)
        lane_valid = pos < l_total
        valid = jnp.logical_and(valid, lane_valid)
        logits = jnp.where(lane_valid, logits, 0.0)

    # Numerically stable log-sum-exp over the class (sublane) axis.
    col_max = jnp.max(logits, axis=0, keepdims=True)           # (1, tile_l)
    shifted = logits - col_max
    log_sum = jnp.log(jnp.sum(jnp.exp(shifted), axis=0, keepdims=True))

    # Gather the target-class *shifted* logit via a one-hot select (no dynamic
    # gather on TPU).  CE = lse - logit[target] = (log_sum + max) - (tgt_shifted + max).
    # Note: out-of-range targets (>= C and != ignore_index) produce an all-zero
    # one-hot, i.e. CE = log_sum, instead of raising as PyTorch would.
    safe_tgt = jnp.where(valid, tgt, 0)
    class_ids = jax.lax.broadcasted_iota(jnp.int32, logits.shape, 0)
    tgt_shifted = jnp.sum(jnp.where(class_ids == safe_tgt, shifted, 0.0),
                          axis=0, keepdims=True)               # (1, tile_l)

    valid_f = valid.astype(jnp.float32)
    per_elem = (log_sum - tgt_shifted) * valid_f               # (1, tile_l)

    slab = jnp.concatenate([per_elem, valid_f], axis=0)        # (2, tile_l)

    if accumulate:
        @pl.when(pl.program_id(1) == 0)
        def _():
            out_ref[...] = jnp.zeros_like(out_ref)
        out_ref[...] += slab
    else:
        out_ref[...] = slab


def focal_loss(logit, target, *, gamma=GAMMA, alpha=ALPHA, batch_average=True,
               ignore_index=IGNORE_INDEX, block_budget_bytes=4 << 20,
               max_tile_l=None, parallel_l=None):
    """Focal loss matching the PyTorch module.

    logit:  (N, C, L) float -- DMA'd in its native dtype (keep it bf16/f32 as
            produced; upcast to f32 happens per-block in VMEM).
    target: (N, L) int -- ignore_index entries are excluded from the mean.

    Divergence from PyTorch: an all-ignored batch returns 0.0 instead of NaN.
    """
    n, c, l = logit.shape
    tgt = target.reshape(n, 1, l).astype(jnp.int32)
    itemsize = jnp.dtype(logit.dtype).itemsize

    # ---- byte-budget-driven lane tiling -----------------------------------
    # Aim for a multi-MiB logit block (~85%+ of HBM roofline); tile_l must be
    # a multiple of 128 unless it covers the whole of L.
    tile_l = (block_budget_bytes // max(c * itemsize, 1)) // 128 * 128
    tile_l = max(int(tile_l), 128)
    if max_tile_l is not None:
        tile_l = min(tile_l, max(128, (int(max_tile_l) // 128) * 128))
    if tile_l >= l:
        tile_l = l
    num_l_tiles = pl.cdiv(l, tile_l)
    mask_lanes = (l % tile_l) != 0

    # ---- grid layout: accumulate over j vs. per-(i,j) partial slabs --------
    # Per-(i,j) slabs let both v7x TensorCores work even when N is tiny; only
    # worth it when the extra writeback (8 B/pos) is small vs the logit read.
    if parallel_l is None:
        parallel_l = (num_l_tiles > 1) and (c * itemsize >= 64)
    accumulate = not parallel_l
    num_out_j = 1 if accumulate else num_l_tiles
    if accumulate:
        out_index_map = lambda i, j: (i, 0, 0, 0)
        dim_sem = ("parallel", "arbitrary")
    else:
        out_index_map = lambda i, j: (i, j, 0, 0)
        dim_sem = ("parallel", "parallel")

    kernel = functools.partial(
        _focal_ce_kernel, l_total=l, tile_l=tile_l, ignore_index=ignore_index,
        accumulate=accumulate, mask_lanes=mask_lanes)

    # ---- explicit VMEM budget ----------------------------------------------
    # Double-buffered logit + target blocks plus the output slab(s) + slack.
    # Raises v5e's 16 MiB scoped default; capped below v7x's 64 MiB physical.
    block_bytes = c * tile_l * itemsize
    vmem_need = 2 * block_bytes + 2 * (tile_l * 4) + 2 * (2 * tile_l * 4) + (8 << 20)
    vmem_limit = int(min(max(vmem_need, 32 << 20), 48 << 20))

    cost = pl.CostEstimate(
        flops=8 * n * c * l,
        transcendentals=n * c * l,
        bytes_accessed=n * c * l * itemsize + n * l * 4
                       + n * num_out_j * 2 * tile_l * 4)

    out = pl.pallas_call(
        kernel,
        out_shape=jax.ShapeDtypeStruct((n, num_out_j, 2, tile_l), jnp.float32),
        grid_spec=pltpu.PrefetchScalarGridSpec(
            num_scalar_prefetch=0,
            grid=(n, num_l_tiles),
            in_specs=[pl.BlockSpec((None, c, tile_l), lambda i, j: (i, 0, j)),
                      pl.BlockSpec((None, 1, tile_l), lambda i, j: (i, 0, j))],
            out_specs=pl.BlockSpec((None, None, 2, tile_l), out_index_map)),
        compiler_params=pltpu.CompilerParams(
            dimension_semantics=dim_sem,
            vmem_limit_bytes=vmem_limit),
        cost_estimate=cost,
    )(logit, tgt)

    total = jnp.sum(out[:, :, 0, :])
    count = jnp.maximum(jnp.sum(out[:, :, 1, :]), 1.0)  # guard all-ignored batch
    ce = total / count                                    # size_average over valid
    logpt = -ce
    pt = jnp.exp(logpt)
    if alpha is not None:
        logpt = logpt * alpha
    loss = -(1.0 - pt) ** gamma * logpt
    if batch_average:
        loss = loss / n
    return loss


def _focal_loss_ref(logit, target, *, ignore_index=IGNORE_INDEX,
                    gamma=GAMMA, alpha=ALPHA):
    """Pure-JAX reference matching the PyTorch module."""
    n, c, l = logit.shape
    rows = jnp.transpose(logit, (0, 2, 1)).reshape(-1, c).astype(jnp.float32)
    tgt = target.reshape(-1)
    valid = tgt != ignore_index
    logp = jax.nn.log_softmax(rows, axis=-1)
    tl = logp[jnp.arange(rows.shape[0]), jnp.where(valid, tgt, 0)]
    ce = -(jnp.sum(tl * valid) / jnp.maximum(jnp.sum(valid), 1))
    logpt = -ce
    pt = jnp.exp(logpt)
    logpt = logpt * alpha
    loss = -(1.0 - pt) ** gamma * logpt
    return loss / n


if __name__ == "__main__":
    key = jax.random.PRNGKey(0)

    # Case 1: small, single lane tile (accumulate path, no ragged masking).
    n, c, l = 2, 5, 50
    k1, k2, k3 = jax.random.split(key, 3)
    logit = jax.random.normal(k1, (n, c, l), dtype=jnp.float32)
    target = jax.random.randint(k2, (n, l), 0, c)
    ignore_mask = jax.random.bernoulli(k3, 0.1, (n, l))
    target = jnp.where(ignore_mask, IGNORE_INDEX, target).astype(jnp.int32)

    loss = focal_loss(logit, target)
    jax.block_until_ready(loss)
    ref = _focal_loss_ref(logit, target)
    assert jnp.allclose(loss, ref, rtol=1e-5, atol=1e-5), (loss, ref)

    # Case 2: multiple lane tiles + ragged tail, C*itemsize >= 64 so both grid
    # axes are 'parallel' (per-(i,j) partial slabs path).
    n2, c2, l2 = 2, 21, 300
    k4, k5, k6 = jax.random.split(jax.random.PRNGKey(1), 3)
    logit2 = jax.random.normal(k4, (n2, c2, l2), dtype=jnp.float32)
    target2 = jax.random.randint(k5, (n2, l2), 0, c2)
    ignore_mask2 = jax.random.bernoulli(k6, 0.1, (n2, l2))
    target2 = jnp.where(ignore_mask2, IGNORE_INDEX, target2).astype(jnp.int32)

    loss2 = focal_loss(logit2, target2, max_tile_l=128)
    jax.block_until_ready(loss2)
    ref2 = _focal_loss_ref(logit2, target2)
    assert jnp.allclose(loss2, ref2, rtol=1e-5, atol=1e-5), (loss2, ref2)

    # Case 3: multiple lane tiles + ragged tail with small C -> resident
    # accumulator over the 'arbitrary' j axis (init/+=/writeback path).
    n3, c3, l3 = 2, 5, 300
    k7, k8, k9 = jax.random.split(jax.random.PRNGKey(2), 3)
    logit3 = jax.random.normal(k7, (n3, c3, l3), dtype=jnp.float32)
    target3 = jax.random.randint(k8, (n3, l3), 0, c3)
    ignore_mask3 = jax.random.bernoulli(k9, 0.1, (n3, l3))
    target3 = jnp.where(ignore_mask3, IGNORE_INDEX, target3).astype(jnp.int32)

    loss3 = focal_loss(logit3, target3, max_tile_l=128)
    jax.block_until_ready(loss3)
    ref3 = _focal_loss_ref(logit3, target3)
    assert jnp.allclose(loss3, ref3, rtol=1e-5, atol=1e-5), (loss3, ref3)

    # Case 4: bf16 logits fed in their narrow dtype (upcast happens in VMEM).
    n4, c4, l4 = 2, 21, 256
    k10, k11, k12 = jax.random.split(jax.random.PRNGKey(3), 3)
    logit4 = jax.random.normal(k10, (n4, c4, l4), dtype=jnp.bfloat16)
    target4 = jax.random.randint(k11, (n4, l4), 0, c4)
    ignore_mask4 = jax.random.bernoulli(k12, 0.1, (n4, l4))
    target4 = jnp.where(ignore_mask4, IGNORE_INDEX, target4).astype(jnp.int32)

    loss4 = focal_loss(logit4, target4)
    jax.block_until_ready(loss4)
    ref4 = _focal_loss_ref(logit4, target4)
    assert jnp.allclose(loss4, ref4, rtol=1e-4, atol=1e-5), (loss4, ref4)

    print("KERNEL_OK")
</pallas_src>

<mosaic_0001>
module attributes {stable_mosaic.version = 11 : i64} {
  func.func @_focal_ce_kernel(%arg0: i32, %arg1: i32, %arg2: memref<1x5x50xf32, #tpu.memory_space<vmem>>, %arg3: memref<1x1x50xi32, #tpu.memory_space<vmem>>, %arg4: memref<1x1x2x50xf32, #tpu.memory_space<vmem>>) attributes {dimension_semantics = [#tpu.dimension_semantics<parallel>, #tpu.dimension_semantics<arbitrary>], iteration_bounds = array<i64: 2, 1>, scalar_prefetch = 0 : i64, scratch_operands = 0 : i64, tpu.core_type = #tpu.core_type<tc>, window_params = [{transform_indices = @transform_0, window_bounds = array<i64: 1, 5, 50>}, {transform_indices = @transform_1, window_bounds = array<i64: 1, 1, 50>}, {transform_indices = @transform_2, window_bounds = array<i64: 1, 1, 2, 50>}]} {
    %c0 = arith.constant 0 : index
    %c0_0 = arith.constant 0 : index
    %c0_1 = arith.constant 0 : index
    %0 = vector.load %arg2[%c0, %c0_0, %c0_1] : memref<1x5x50xf32, #tpu.memory_space<vmem>>, vector<1x5x50xf32>
    %1 = vector.shape_cast %0 : vector<1x5x50xf32> to vector<5x50xf32>
    %c0_2 = arith.constant 0 : index
    %c0_3 = arith.constant 0 : index
    %c0_4 = arith.constant 0 : index
    %2 = vector.load %arg3[%c0_2, %c0_3, %c0_4] : memref<1x1x50xi32, #tpu.memory_space<vmem>>, vector<1x1x50xi32>
    %3 = vector.shape_cast %2 : vector<1x1x50xi32> to vector<1x50xi32>
    %c255_i32 = arith.constant 255 : i32
    %4 = vector.broadcast %c255_i32 : i32 to vector<1x50xi32>
    %5 = arith.cmpi ne, %3, %4 : vector<1x50xi32>
    %cst = arith.constant dense<0xFF800000> : vector<50xf32>
    %6 = vector.multi_reduction <maximumf>, %1, %cst [0] : vector<5x50xf32> to vector<50xf32>
    %7 = vector.shape_cast %6 : vector<50xf32> to vector<1x50xf32>
    %8 = vector.broadcast %7 : vector<1x50xf32> to vector<5x50xf32>
    %9 = arith.subf %1, %8 : vector<5x50xf32>
    %10 = math.exp %9 : vector<5x50xf32>
    %cst_5 = arith.constant dense<0.000000e+00> : vector<50xf32>
    %11 = vector.multi_reduction <add>, %10, %cst_5 [0] : vector<5x50xf32> to vector<50xf32>
    %12 = vector.shape_cast %11 : vector<50xf32> to vector<1x50xf32>
    %13 = math.log %12 : vector<1x50xf32>
    %c0_i32 = arith.constant 0 : i32
    %14 = vector.broadcast %c0_i32 : i32 to vector<1x50xi32>
    %15 = arith.select %5, %3, %14 : vector<1x50xi1>, vector<1x50xi32>
    %16 = tpu.iota {dimensions = array<i32: 0>} : vector<5x50xi32>
    %17 = vector.broadcast %15 : vector<1x50xi32> to vector<5x50xi32>
    %18 = arith.cmpi eq, %16, %17 : vector<5x50xi32>
    %cst_6 = arith.constant 0.000000e+00 : f32
    %19 = vector.broadcast %cst_6 : f32 to vector<5x50xf32>
    %20 = arith.select %18, %9, %19 : vector<5x50xi1>, vector<5x50xf32>
    %cst_7 = arith.constant dense<0.000000e+00> : vector<50xf32>
    %21 = vector.multi_reduction <add>, %20, %cst_7 [0] : vector<5x50xf32> to vector<50xf32>
    %22 = vector.shape_cast %21 : vector<50xf32> to vector<1x50xf32>
    %23 = arith.extui %5 : vector<1x50xi1> to vector<1x50xi32>
    %24 = arith.sitofp %23 : vector<1x50xi32> to vector<1x50xf32>
    %25 = arith.subf %13, %22 : vector<1x50xf32>
    %26 = arith.mulf %25, %24 : vector<1x50xf32>
    %27 = tpu.concatenate %26, %24 in 0 : vector<1x50xf32>, vector<1x50xf32> -> vector<2x50xf32>
    %c0_i32_8 = arith.constant 0 : i32
    %28 = arith.cmpi eq, %arg1, %c0_i32_8 : i32
    %29 = arith.extui %28 : i1 to i32
    %c0_i32_9 = arith.constant 0 : i32
    %30 = arith.cmpi ne, %29, %c0_i32_9 : i32
    scf.if %30 {
      %cst_18 = arith.constant 0.000000e+00 : f32
      %37 = vector.broadcast %cst_18 : f32 to vector<2x50xf32>
      %c0_19 = arith.constant 0 : index
      %c0_20 = arith.constant 0 : index
      %c0_21 = arith.constant 0 : index
      %c0_22 = arith.constant 0 : index
      %38 = vector.load %arg4[%c0_19, %c0_20, %c0_21, %c0_22] : memref<1x1x2x50xf32, #tpu.memory_space<vmem>>, vector<1x1x2x50xf32>
      %39 = vector.shape_cast %38 : vector<1x1x2x50xf32> to vector<2x50xf32>
      %40 = vector.shape_cast %37 : vector<2x50xf32> to vector<1x1x2x50xf32>
      tpu.vector_store %arg4[%c0_19, %c0_20, %c0_21, %c0_22], %40 {strides = array<i32>} : memref<1x1x2x50xf32, #tpu.memory_space<vmem>>, vector<1x1x2x50xf32>,
    } else {
    }
    %c0_10 = arith.constant 0 : index
    %c0_11 = arith.constant 0 : index
    %c0_12 = arith.constant 0 : index
    %c0_13 = arith.constant 0 : index
    %31 = vector.load %arg4[%c0_10, %c0_11, %c0_12, %c0_13] : memref<1x1x2x50xf32, #tpu.memory_space<vmem>>, vector<1x1x2x50xf32>
    %32 = vector.shape_cast %31 : vector<1x1x2x50xf32> to vector<2x50xf32>
    %33 = arith.addf %32, %27 : vector<2x50xf32>
    %c0_14 = arith.constant 0 : index
    %c0_15 = arith.constant 0 : index
    %c0_16 = arith.constant 0 : index
    %c0_17 = arith.constant 0 : index
    %34 = vector.load %arg4[%c0_14, %c0_15, %c0_16, %c0_17] : memref<1x1x2x50xf32, #tpu.memory_space<vmem>>, vector<1x1x2x50xf32>
    %35 = vector.shape_cast %34 : vector<1x1x2x50xf32> to vector<2x50xf32>
    %36 = vector.shape_cast %33 : vector<2x50xf32> to vector<1x1x2x50xf32>
    tpu.vector_store %arg4[%c0_14, %c0_15, %c0_16, %c0_17], %36 {strides = array<i32>} : memref<1x1x2x50xf32, #tpu.memory_space<vmem>>, vector<1x1x2x50xf32>,
    return
  }
  func.func @transform_0(%arg0: i32, %arg1: i32) -> (i32, i32, i32) {
    %c0_i32 = arith.constant 0 : i32
    %c0_i32_0 = arith.constant 0 : i32
    return %arg0, %c0_i32, %arg1 : i32, i32, i32
  }
  func.func @transform_1(%arg0: i32, %arg1: i32) -> (i32, i32, i32) {
    %c0_i32 = arith.constant 0 : i32
    %c0_i32_0 = arith.constant 0 : i32
    return %arg0, %c0_i32, %arg1 : i32, i32, i32
  }
  func.func @transform_2(%arg0: i32, %arg1: i32) -> (i32, i32, i32, i32) {
    %c0_i32 = arith.constant 0 : i32
    %c0_i32_0 = arith.constant 0 : i32
    %c0_i32_1 = arith.constant 0 : i32
    %c0_i32_2 = arith.constant 0 : i32
    return %arg0, %c0_i32, %c0_i32_0, %c0_i32_1 : i32, i32, i32, i32
  }
}

</mosaic_0001>

<llo_original>
// kernel: tpu_custom_call.1
$region0: #{tpu_custom_call.1}
  #allocation0 [shape = 'u32[]', space=smem, size = 0x4, offset = 0x4, fixed_abs, tag = 'smem constant byte address 0x4 - core index']
  #allocation1 [shape = 'u32[144,128]{1,0:T(1,128)}', space=vmem, size = 0x12000, scoped, tag = 'internal scratch']
  %s0 = inlined_call_operand.vmem [shape: f32[2,5,50], index: 0, kind: input, shape index: {}]
  %s1 = inlined_call_operand.vmem [shape: s32[2,1,50], index: 1, kind: input, shape index: {}]
  %s2 = inlined_call_operand.hbm [shape: f32[2,1,2,50], index: 2, kind: output, shape index: {}]
  %s3 = sld [smem:[#allocation0]]
  $region45: #{tpu_custom_call.1} parent=0
    _
  %s5 = ssub.s32 1, %s3
  %s6 = scalar_select 0, %s5, %s3
  $region1: #{tpu_custom_call.1} parent=0
    #allocation2 [shape = 'u8[2048]{0}', space=vmem, size = 0x800, scoped, tag = 'output window, operand 0']
    #allocation3 [shape = 's32[2]{0}', space=sflag, size = 0x8, scoped, tag = 'scoped memory for tpu_custom_call.1']
    %7 = vsyncpa [#allocation3], 0
    %s8 = scalar_lea.sflag [#allocation3], 1
    %9 = vsyncpa %s8, 0
    loop: start=0, step=1, limit=4
    $region2: #{tpu_custom_call.1} parent=1 // loop_pre_header
      _
    $region3: #{tpu_custom_call.1} parent=1 // loop_header
      %s11 = sphi 0, %s15
      %p12 = scmp.ge.s32.totalorder %s11, 4
      %s18 = sphi 0, %s30
      %s19 = sphi 0, %s26
      %s20 = sphi 0, %s18
      %s21 = sphi 0, %s19
      %s22 = sphi 0, %s20
      %s23 = sphi 0, %s21
      %s35 = sphi 0, %s37
      %s38 = sphi 0, %s35
      %s39 = sphi 0, %s38
      %s55 = sphi 0, %s39
      %s63 = sphi 0, %s65
      %s66 = sphi 0, %s63
      %s67 = sphi 0, %s66
      %s83 = sphi 0, %s67
      %s89 = sphi 0, %s91
      %s92 = sphi 0, %s89
      %s93 = sphi 0, %s92
      %s109 = sphi 0, %s93
    $region4: #{tpu_custom_call.1} parent=1 // loop_header_branch
      %14 = sbr.rel (%p12) target = $region8
    $region5: #{tpu_custom_call.1} parent=1 // loop_body
      %s16 = ssub.s32 %s11, 1
      %s17 = ssub.s32 %s11, 2
      %s24 = sadd.s32 1, %s19
      %p25 = scmp.ge.s32.totalorder %s24, 1
      %s26 = scalar_select %p25, 0, %s24
      %s27 = sadd.s32 1, %s18
      %s28 = scalar_select %p25, %s27, %s18
      %p29 = scmp.ge.s32.totalorder %s28, 2
      %s30 = scalar_select %p29, 0, %s28
      %s31 = ssub.s32 %s18, %s30
      %s32 = ssub.s32 %s19, %s26
      %s33 = sor.u32 %s31, %s32
      %p34 = scmp.eq.s32.totalorder %s33, 0
      %s36 = sadd.s32 %s35, 1
      %s37 = scalar_select %p34, %s35, %s36
      %p40 = pneg %p34
      %p41 = scmp.eq.s32.totalorder %s11, 1
      %p42 = por %p40, %p41
      %p43 = scmp.ne.s32.totalorder %s35, %s38
      %p44 = scmp.eq.s32.totalorder %s11, 0
      %p45 = por %p43, %p44
      %p46 = scmp.ne.s32.totalorder %s35, %s38
      %p47 = scmp.eq.s32.totalorder %s16, 1
      %p48 = por %p46, %p47
      %p49 = scmp.ne.s32.totalorder %s38, %s39
      %p50 = scmp.eq.s32.totalorder %s16, 0
      %p51 = por %p49, %p50
      %p52 = scmp.ne.s32.totalorder %s38, %s39
      %p53 = scmp.eq.s32.totalorder %s17, 1
      %p54 = por %p52, %p53
      %p56 = scmp.ne.s32.totalorder %s39, %s55
      %p57 = scmp.eq.s32.totalorder %s17, 0
      %p58 = por %p56, %p57
      %s59 = ssub.s32 %s18, %s30
      %s60 = ssub.s32 %s19, %s26
      %s61 = sor.u32 %s59, %s60
      %p62 = scmp.eq.s32.totalorder %s61, 0
      %s64 = sadd.s32 %s63, 1
      %s65 = scalar_select %p62, %s63, %s64
      %p68 = pneg %p62
      %p69 = scmp.eq.s32.totalorder %s11, 1
      %p70 = por %p68, %p69
      %p71 = scmp.ne.s32.totalorder %s63, %s66
      %p72 = scmp.eq.s32.totalorder %s11, 0
      %p73 = por %p71, %p72
      %p74 = scmp.ne.s32.totalorder %s63, %s66
      %p75 = scmp.eq.s32.totalorder %s16, 1
      %p76 = por %p74, %p75
      %p77 = scmp.ne.s32.totalorder %s66, %s67
      %p78 = scmp.eq.s32.totalorder %s16, 0
      %p79 = por %p77, %p78
      %p80 = scmp.ne.s32.totalorder %s66, %s67
      %p81 = scmp.eq.s32.totalorder %s17, 1
      %p82 = por %p80, %p81
      %p84 = scmp.ne.s32.totalorder %s67, %s83
      %p85 = scmp.eq.s32.totalorder %s17, 0
      %p86 = por %p84, %p85
      %s87 = ssub.s32 %s18, %s30
      %p88 = scmp.eq.s32.totalorder %s87, 0
      %s90 = sadd.s32 %s89, 1
      %s91 = scalar_select %p88, %s89, %s90
      %p94 = pneg %p88
      %p95 = scmp.eq.s32.totalorder %s11, 1
      %p96 = por %p94, %p95
      %p97 = scmp.ne.s32.totalorder %s89, %s92
      %p98 = scmp.eq.s32.totalorder %s11, 0
      %p99 = por %p97, %p98
      %p100 = scmp.ne.s32.totalorder %s89, %s92
      %p101 = scmp.eq.s32.totalorder %s16, 1
      %p102 = por %p100, %p101
      %p103 = scmp.ne.s32.totalorder %s92, %s93
      %p104 = scmp.eq.s32.totalorder %s16, 0
      %p105 = por %p103, %p104
      %p106 = scmp.ne.s32.totalorder %s92, %s93
      %p107 = scmp.eq.s32.totalorder %s17, 1
      %p108 = por %p106, %p107
      %p110 = scmp.ne.s32.totalorder %s93, %s109
      %p111 = scmp.eq.s32.totalorder %s17, 0
      %p112 = por %p110, %p111
      %p113 = scmp.le.s32.totalorder 1, %s11
      %p114 = scmp.lt.s32.totalorder %s11, 3
      %p115 = pnand %p113, %p114
      %p116 = pneg %p115
      // Predicated region
      $region9: #{tpu_custom_call.1} parent=5 // pred_check
        _
      $region10: #{tpu_custom_call.1} parent=5 // pred_check_branch
        %118 = sbr.rel (%p115) target = $region12
      $region11: #{tpu_custom_call.1} parent=5 // pred_region
        %s119 = ssub.s32 %s11, 1
      $region12: #{tpu_custom_call.1} parent=5 // pred_fallthru
        _
      %p120 = scmp.lt.s32.totalorder %s11, 2
      // Predicated region
      $region13: #{tpu_custom_call.1} parent=5 // pred_check
        %p121 = pneg %p120
      $region14: #{tpu_custom_call.1} parent=5 // pred_check_branch
        %123 = sbr.rel (%p121) target = $region16
      $region15: #{tpu_custom_call.1} parent=5 // pred_region
        // Predicated region
        $region17: #{tpu_custom_call.1} parent=15 // pred_check
          %p124 = pneg %p45
        $region18: #{tpu_custom_call.1} parent=15 // pred_check_branch
          %126 = sbr.rel (%p124) target = $region20
        $region19: #{tpu_custom_call.1} parent=15 // pred_region
          %p127 = scmp.lt.s32.totalorder %s18, 1
          %s128 = scalar_select %p127, %s18, 1
          %p129 = scmp.lt.s32.totalorder %s19, 0
          %s130 = scalar_select %p129, %s19, 0
          %s131 = sadd.s32 %s130, %s128
          %s132 = smul.addr %s131, 8
          %s133 = scalar_lea.vmem %s0, %s132
        $region20: #{tpu_custom_call.1} parent=15 // pred_fallthru
          _
        // Predicated region
        $region21: #{tpu_custom_call.1} parent=15 // pred_check
          %p134 = pneg %p73
        $region22: #{tpu_custom_call.1} parent=15 // pred_check_branch
          %136 = sbr.rel (%p134) target = $region24
        $region23: #{tpu_custom_call.1} parent=15 // pred_region
          %p137 = scmp.lt.s32.totalorder %s18, 1
          %s138 = scalar_select %p137, %s18, 1
          %p139 = scmp.lt.s32.totalorder %s19, 0
          %s140 = scalar_select %p139, %s19, 0
          %s141 = sadd.s32 %s140, %s138
          %s142 = scalar_lea.vmem %s1, %s141
        $region24: #{tpu_custom_call.1} parent=15 // pred_fallthru
          _
      $region16: #{tpu_custom_call.1} parent=5 // pred_fallthru
        _
      %p143 = scmp.le.s32.totalorder 1, %s11
      %p144 = scmp.lt.s32.totalorder %s11, 3
      %p145 = pnand %p143, %p144
      %p146 = pneg %p145
      // Predicated region
      $region25: #{tpu_custom_call.1} parent=5 // pred_check
        _
      $region26: #{tpu_custom_call.1} parent=5 // pred_check_branch
        %148 = sbr.rel (%p145) target = $region28
      $region27: #{tpu_custom_call.1} parent=5 // pred_region
        %s149 = ssub.s32 %s11, 1
        %p150 = scmp.lt.s32.totalorder %s20, 1
        %s151 = scalar_select %p150, %s20, 1
        %p152 = scmp.lt.s32.totalorder %s21, 0
        %s153 = scalar_select %p152, %s21, 0
        %s154 = sadd.s32 %s153, %s151
        %s155 = smul.addr %s154, 8
        %s156 = scalar_lea.vmem %s0, %s155
        %p157 = pneg %p51
        %p158 = pneg %p48
        %p159 = scmp.lt.s32.totalorder %s20, 1
        %s160 = scalar_select %p159, %s20, 1
        %p161 = scmp.lt.s32.totalorder %s21, 0
        %s162 = scalar_select %p161, %s21, 0
        %s163 = sadd.s32 %s162, %s160
        %s164 = scalar_lea.vmem %s1, %s163
        %p165 = pneg %p79
        %p166 = pneg %p76
        %p167 = pneg %p105
        %p168 = pneg %p102
        %s169 = sand.u32 %s92, 1
        %s170 = scalar_lea.sflag [#allocation3], %s169
        %s171 = sand.u32 %s92, 1
        %s172 = smul.addr %s171, 2
        %s173 = scalar_lea.vmem [#allocation2], %s172
        %p174 = scmp.lt.s32.totalorder %s20, 1
        %s175 = scalar_select %p174, %s20, 1
        %p176 = scmp.lt.s32.totalorder %s21, 0
        %s177 = scalar_select %p176, %s21, 0
        %s178 = sadd.s32 %s177, %s175
        %s179 = smul.addr %s178, 8
        %s180 = scalar_lea.vmem %s0, %s179
        %p181 = scmp.lt.s32.totalorder %s20, 1
        %s182 = scalar_select %p181, %s20, 1
        %p183 = scmp.lt.s32.totalorder %s21, 0
        %s184 = scalar_select %p183, %s21, 0
        %s185 = sadd.s32 %s184, %s182
        %s186 = scalar_lea.vmem %s1, %s185
        %v187 = vld [vmem:[%s180] sm:$0x1f]
        %v188 = vld [vmem:[%s186] sm:$0x1]
        %vm189 = vcmp.ne.s32.totalorder %v188, 255
        %vm190 = vcmask 405504
        %v191 = vsel %vm190, %v187, -inf
        %v192 = vrot.slane %v191, 4
        %v193 = vmax.f32 %v191, %v192
        %v194 = vrot.slane %v193, 2
        %v195 = vmax.f32 %v193, %v194
        %v196 = vrot.slane %v195, 1
        %v197 = vmax.f32 %v195, %v196
        %v198 = vsub.f32 %v187, %v197
        %v199 = vmul.f32 %v198, 1.442695
        %v200 = vpow.pop %v199
        %v201 = vsel %vm190, %v200, 0.0
        %v202 = vrot.slane %v201, 4
        %v203 = vadd.f32 %v201, %v202
        %v204 = vrot.slane %v203, 2
        %v205 = vadd.f32 %v203, %v204
        %v206 = vrot.slane %v205, 1
        %v207 = vadd.f32 %v205, %v206
        %v208 = vlog2.pop %v207
        %v209 = vmul.f32 %v208, 0.6931472
        %v210 = vsel %vm189, %v188, 0
        %v211 = vlaneseq
        %v212 = vshrl.u32 %v211, 7
        %v213 = vlaneseq
        %v214 = vshrl.u32 %v213, 7
        %v215 = vsub.s32 0, %v214
        %v216 = vrot.slane %v210, %v215
        %vm217 = vcmp.eq.s32.totalorder %v212, %v216
        %v218 = vsel %vm217, %v198, 0.0
        %v219 = vsel %vm190, %v218, 0.0
        %v220 = vrot.slane %v219, 4
        %v221 = vadd.f32 %v219, %v220
        %v222 = vrot.slane %v221, 2
        %v223 = vadd.f32 %v221, %v222
        %v224 = vrot.slane %v223, 1
        %v225 = vadd.f32 %v223, %v224
        %v226 = vsel %vm189, 1, 0
        %v227 = vcvt.s32.f32 %v226
        %v228 = vsub.f32 %v209, %v225
        %v229 = vmul.f32 %v228, %v227
        %v231 = vlaneseq
        %v232 = vshrl.u32 %v231, 7
        %v233 = vsub.s32 0, %v232
        %v234 = vrot.slane %v227, %v233
        %vm236 = vcmask 1040384
        %v237 = vsel %vm236, %v229, %v234
        %p238 = scmp.eq.s32.totalorder %s21, 0
        // Predicated region
        $region29: #{tpu_custom_call.1} parent=27 // pred_check
          %p239 = pneg %p238
        $region30: #{tpu_custom_call.1} parent=27 // pred_check_branch
          %241 = sbr.rel (%p239) target = $region32
        $region31: #{tpu_custom_call.1} parent=27 // pred_region
          %vm242 = vcmask 402432
          %243 = vst.msk [vmem:[%s173] sm:$0x3] %vm242, 0.0
        $region32: #{tpu_custom_call.1} parent=27 // pred_fallthru
          _
        %v244 = vld [vmem:[%s173] sm:$0x3]
        %v245 = vadd.f32 %v244, %v237
        %vm246 = vcmask 402432
        %247 = vst.msk [vmem:[%s173] sm:$0x3] %vm246, %v245
        %s248 = sand.u32 %s92, 1
        %s249 = scalar_lea.sflag [#allocation3], %s248
        %s250 = sand.u32 %s92, 1
        %s251 = smul.addr %s250, 2
        %s252 = scalar_lea.vmem [#allocation2], %s251
        // Predicated region
        $region33: #{tpu_custom_call.1} parent=27 // pred_check
          %p253 = pneg %p102
        $region34: #{tpu_custom_call.1} parent=27 // pred_check_branch
          %255 = sbr.rel (%p253) target = $region36
        $region35: #{tpu_custom_call.1} parent=27 // pred_region
          %s257 = ssub.s32 32, 32
          %258 = vsyncadd %s249, %s257
          %s259 = smul.addr %s20, 32
          %s260 = scalar_lea.hbm %s2, %s259
          %s262 = sshll.u32 %s252, 4
          %s263 = int_to_ptr.vmem [resolvable:$true] %s262
          %265 = dma.vmem_to_hbm [thread:$0]  %s263, 32, %s260, %s249
        $region36: #{tpu_custom_call.1} parent=27 // pred_fallthru
          _
      $region28: #{tpu_custom_call.1} parent=5 // pred_fallthru
        _
      %p266 = scmp.le.s32.totalorder 2, %s11
      // Predicated region
      $region37: #{tpu_custom_call.1} parent=5 // pred_check
        %p267 = pneg %p266
      $region38: #{tpu_custom_call.1} parent=5 // pred_check_branch
        %269 = sbr.rel (%p267) target = $region40
      $region39: #{tpu_custom_call.1} parent=5 // pred_region
        %s270 = ssub.s32 %s11, 2
        // Predicated region
        $region41: #{tpu_custom_call.1} parent=39 // pred_check
          %p271 = pneg %p108
        $region42: #{tpu_custom_call.1} parent=39 // pred_check_branch
          %273 = sbr.rel (%p271) target = $region44
        $region43: #{tpu_custom_call.1} parent=39 // pred_region
          %s274 = sand.u32 %s93, 1
          %s275 = scalar_lea.sflag [#allocation3], %s274
          %s276 = sand.u32 %s93, 1
          %s277 = smul.addr %s276, 2
          %s278 = scalar_lea.vmem [#allocation2], %s277
          %279 = dma.done %s275, 32
        $region44: #{tpu_custom_call.1} parent=39 // pred_fallthru
          _
      $region40: #{tpu_custom_call.1} parent=5 // pred_fallthru
        _
    $region6: #{tpu_custom_call.1} parent=1 // loop_footer
      %s15 = sadd.s32 1, %s11
    $region7: #{tpu_custom_call.1} parent=1 // loop_footer_branch
      %10 = sbr.rel target = $region3
    $region8: #{tpu_custom_call.1} parent=1 // loop_exit
      _
    %280 = vsyncpa [#allocation3], 1
    %s281 = scalar_lea.sflag [#allocation3], 1
    %282 = vsyncpa %s281, 1

</llo_original>
